<compile_context>
chip_gen: v6e
topology: v6e:2x2x1
jax: 0.10.0
libtpu: 0.0.40
codegen_flags: <defaults>
</compile_context>

<pallas_src>
import math

import jax
import jax.numpy as jnp
from jax import lax
from jax.experimental import pallas as pl
from jax.experimental.pallas import tpu as pltpu

LANE = 128  # TPU vreg lane width


def _round_up(a, m):
    return (a + m - 1) // m * m


def _vmem_capacity_bytes():
    """Physical VMEM per TensorCore (generation-aware), with a safe fallback."""
    try:
        info = pltpu.get_tpu_info()
        cap = getattr(info, "vmem_capacity_bytes", None)
        if cap:
            return int(cap)
    except Exception:
        pass
    return 64 << 20  # conservative fallback (v7x per-TC VMEM)


# --------------------------- Stage 1: p-norm pooling ---------------------------


def _make_pool_kernel(T, tk, grid_t, c_group, unroll):
    """Streaming L1/Linf pooling over the T axis (all shape params static)."""
    n_sub = tk // LANE
    valid_last = T - (grid_t - 1) * tk          # elements in the last T tile

    def kernel(x_ref, l1_ref, linf_ref, sum_acc, max_acc):
        t = pl.program_id(1)
        C = sum_acc.shape[1]
        groups = [(c0, min(c_group, C - c0)) for c0 in range(0, C, c_group)]

        @pl.when(t == 0)
        def _init():
            # |x| >= 0, so 0 is a valid identity for both the sum and the max.
            sum_acc[...] = jnp.zeros_like(sum_acc)
            max_acc[...] = jnp.zeros_like(max_acc)

        def accumulate(n_full, rem):
            # n_full full 128-lane chunks plus an optional masked tail (static).
            for c0, cw in groups:
                def body(j, carry):
                    s, m = carry
                    start = pl.multiple_of(j * LANE, LANE)
                    chunk = jnp.abs(
                        x_ref[:, c0:c0 + cw, pl.ds(start, LANE)]
                        .astype(jnp.float32))
                    return s + chunk, jnp.maximum(m, chunk)

                s = sum_acc[:, c0:c0 + cw, :]
                m = max_acc[:, c0:c0 + cw, :]
                if n_full > 0:
                    s, m = lax.fori_loop(0, n_full, body, (s, m),
                                         unroll=min(unroll, n_full))
                if rem > 0:
                    # Partially valid chunk of the edge block: lanes >= rem hold
                    # unspecified data and MUST be masked to 0 (identity for
                    # both reductions) before updating the accumulators.
                    start = n_full * LANE
                    chunk = jnp.abs(
                        x_ref[:, c0:c0 + cw, start:start + LANE]
                        .astype(jnp.float32))
                    lane = lax.broadcasted_iota(jnp.int32, chunk.shape, 2)
                    chunk = jnp.where(lane < rem, chunk, 0.0)
                    s = s + chunk
                    m = jnp.maximum(m, chunk)
                sum_acc[:, c0:c0 + cw, :] = s
                max_acc[:, c0:c0 + cw, :] = m

        if valid_last == tk:
            # Every T tile is full: single unmasked code path.
            accumulate(n_sub, 0)
        else:
            if grid_t > 1:
                @pl.when(t < grid_t - 1)
                def _full_tiles():
                    accumulate(n_sub, 0)

            @pl.when(t == grid_t - 1)
            def _edge_tile():
                accumulate(valid_last // LANE, valid_last % LANE)

        @pl.when(t == grid_t - 1)
        def _finalize():
            # Single cross-lane (XLU) reduce of the partial accumulators.
            l1_ref[...] = jnp.sum(sum_acc[...], axis=2)
            linf_ref[...] = jnp.max(max_acc[...], axis=2)

    return kernel


def pnorm_pool(x, *, tile_t=None):
    """x: (B, C, T) float32/bfloat16.  Returns (l1, linf), each (B, C) f32."""
    B, C, T = x.shape
    esize = jnp.dtype(x.dtype).itemsize

    # Split the batch rows across TensorCores (v7x megacore) when the split
    # keeps the output block (b_tile, C) sublane-aligned (b_tile % 8 == 0).
    if B % 2 == 0 and (B // 2) % 8 == 0:
        nsplit = 2
    else:
        nsplit = 1
    b_tile = B // nsplit

    # Sublane-group width for the in-kernel accumulation (bounds vreg
    # pressure); respect the dtype's sublane packing (f32: 8, bf16: 16).
    g = 8 * max(1, 4 // esize)
    if C % g == 0:
        cg = (max(1, 64 // max(1, b_tile)) // g) * g
        c_group = max(g, min(C, cg))
    else:
        c_group = C

    # Generation-aware T-tile sizing: largest lane-dense tile such that the
    # total residency (double-buffered x tile + accumulators + outputs) stays
    # within ~72% of this chip's VMEM, capped at 16 MiB per x buffer.
    cap = _vmem_capacity_bytes()
    acc_bytes = 2 * b_tile * C * LANE * 4          # L1/Linf partial accumulators
    out_bytes = 2 * 2 * b_tile * C * 4             # two outputs, double-buffered
    fixed = acc_bytes + out_bytes + (1 << 20)
    total_budget = min(int(cap * 0.72), 96 << 20)
    per_buf = min(16 << 20, max(1 << 20, (total_budget - fixed) // 2))

    t_cap = _round_up(T, LANE)
    if tile_t is None:
        tk = per_buf // (b_tile * C * esize) // LANE * LANE
        tk = max(LANE, min(tk, t_cap))
    else:
        assert tile_t % LANE == 0
        tk = min(tile_t, t_cap)

    grid_t = (T + tk - 1) // tk

    est = 2 * b_tile * C * tk * esize + fixed
    vmem_limit = int(min(cap - (2 << 20), max(32 << 20, est + (8 << 20))))

    kernel = _make_pool_kernel(T, tk, grid_t, c_group, unroll=4)

    cost = pl.CostEstimate(
        flops=int(3 * B * C * T),                  # abs + add + max per element
        transcendentals=0,
        bytes_accessed=int(B * C * T * esize + 2 * B * C * 4),
    )

    return pl.pallas_call(
        kernel,
        out_shape=(jax.ShapeDtypeStruct((B, C), jnp.float32),
                   jax.ShapeDtypeStruct((B, C), jnp.float32)),
        grid_spec=pltpu.PrefetchScalarGridSpec(
            num_scalar_prefetch=0,
            grid=(nsplit, grid_t),
            in_specs=[pl.BlockSpec((b_tile, C, tk), lambda p, t: (p, 0, t))],
            out_specs=[pl.BlockSpec((b_tile, C), lambda p, t: (p, 0)),
                       pl.BlockSpec((b_tile, C), lambda p, t: (p, 0))],
            scratch_shapes=[pltpu.VMEM((b_tile, C, LANE), jnp.float32),
                            pltpu.VMEM((b_tile, C, LANE), jnp.float32)],
        ),
        compiler_params=pltpu.CompilerParams(
            dimension_semantics=("parallel", "arbitrary"),
            vmem_limit_bytes=vmem_limit,
        ),
        cost_estimate=cost,
    )(x)


# ---------------------------- Stage 2: MLP + BN --------------------------------


def _mlp_bn_kernel(l1_ref, linf_ref, w1a_ref, w1b_ref, b1_ref, g_ref, beta_ref,
                   w2_ref, b2_ref, o_ref):
    # feat @ W1 with feat = concat([l1, linf], 1) and W1 = [W1a; W1b].
    h = (jnp.dot(l1_ref[...], w1a_ref[...], preferred_element_type=jnp.float32)
         + jnp.dot(linf_ref[...], w1b_ref[...],
                   preferred_element_type=jnp.float32)
         + b1_ref[...])
    h = jnp.maximum(h, 0.0)                        # ReLU

    # BatchNorm1d (training mode: full-batch statistics, biased var, eps=1e-5).
    mu = jnp.mean(h, axis=0, keepdims=True)
    var = jnp.mean((h - mu) * (h - mu), axis=0, keepdims=True)
    h = (h - mu) * lax.rsqrt(var + 1e-5)
    h = h * g_ref[...] + beta_ref[...]

    out = (jnp.dot(h, w2_ref[...], preferred_element_type=jnp.float32)
           + b2_ref[...])
    o_ref[...] = out.astype(o_ref.dtype)


def mlp_bn(l1, linf, w1, b1, gamma, beta, w2, b2):
    B, C = l1.shape
    H = w1.shape[1]
    O = w2.shape[1]
    w1a, w1b = w1[:C, :], w1[C:, :]
    return pl.pallas_call(
        _mlp_bn_kernel,
        out_shape=jax.ShapeDtypeStruct((B, O), jnp.float32),
    )(l1, linf, w1a, w1b,
      b1.reshape(1, H), gamma.reshape(1, H), beta.reshape(1, H),
      w2, b2.reshape(1, O))


# ------------------------------ Full forward -----------------------------------


def pnorm_pooling(x, w1, b1, gamma, beta, w2, b2, *, tile_t=None):
    """x: (B, C, T).  w1: (2C, H), b1/gamma/beta: (H,), w2: (H, O), b2: (O,).
    Returns (B, O) float32."""
    B, C, T = x.shape
    assert w1.shape[0] == 2 * C
    l1, linf = pnorm_pool(x, tile_t=tile_t)
    return mlp_bn(l1, linf, w1, b1, gamma, beta, w2, b2)


def pnorm_pooling_ref(x, w1, b1, gamma, beta, w2, b2):
    ax = jnp.abs(x.astype(jnp.float32))
    feat = jnp.concatenate([jnp.sum(ax, axis=2), jnp.max(ax, axis=2)], axis=1)
    h = jnp.maximum(feat @ w1 + b1, 0.0)
    mu = jnp.mean(h, axis=0, keepdims=True)
    var = jnp.mean((h - mu) ** 2, axis=0, keepdims=True)
    h = (h - mu) * lax.rsqrt(var + 1e-5) * gamma + beta
    return h @ w2 + b2


# TODO(synk): be_mean_pool=True ctor branch (plain mean over dim 2) and the
# BatchNorm running-stat (momentum) buffer updates are not modeled; the forward
# output with the default config does not depend on either.


if __name__ == "__main__":
    B, C, T = 16, 16, 300        # batch, channels (input_size), sequence length
    H = 2 * C                    # mlp_sizes[0] = input_size * len(p)
    O = C                        # mlp_sizes[1] = input_size

    key = jax.random.PRNGKey(0)
    kx, k1, k2, k3, k4 = jax.random.split(key, 5)

    x = jax.random.normal(kx, (B, C, T), dtype=jnp.float32)

    # Deterministic parameter init (PyTorch-Linear-like uniform ranges).
    lim1 = 1.0 / math.sqrt(2 * C)
    w1 = jax.random.uniform(k1, (2 * C, H), minval=-lim1, maxval=lim1,
                            dtype=jnp.float32)
    b1 = jax.random.uniform(k2, (H,), minval=-lim1, maxval=lim1,
                            dtype=jnp.float32)
    gamma = jnp.ones((H,), dtype=jnp.float32)   # BatchNorm1d default weight
    beta = jnp.zeros((H,), dtype=jnp.float32)   # BatchNorm1d default bias
    lim2 = 1.0 / math.sqrt(H)
    w2 = jax.random.uniform(k3, (H, O), minval=-lim2, maxval=lim2,
                            dtype=jnp.float32)
    b2 = jax.random.uniform(k4, (O,), minval=-lim2, maxval=lim2,
                            dtype=jnp.float32)

    ref = pnorm_pooling_ref(x, w1, b1, gamma, beta, w2, b2)

    # 1) Auto-sized T tile: single T step, in-kernel masked ragged tail (T=300).
    out = jax.block_until_ready(pnorm_pooling(x, w1, b1, gamma, beta, w2, b2))
    assert out.shape == (B, O)
    assert jnp.allclose(out, ref, atol=1e-4, rtol=1e-4), "mismatch (auto tile)"

    # 2) Forced small tile: multi-step streamed reduction + masked edge tile,
    #    exercising the init / accumulate / edge / finalize grid pipeline.
    out2 = jax.block_until_ready(
        pnorm_pooling(x, w1, b1, gamma, beta, w2, b2, tile_t=128))
    assert jnp.allclose(out2, ref, atol=1e-4, rtol=1e-4), "mismatch (tiled T)"

    # 3) bf16 streaming of x (half the HBM traffic); accumulation stays f32.
    x_bf16 = x.astype(jnp.bfloat16)
    ref_bf16 = pnorm_pooling_ref(x_bf16, w1, b1, gamma, beta, w2, b2)
    out3 = jax.block_until_ready(
        pnorm_pooling(x_bf16, w1, b1, gamma, beta, w2, b2))
    assert jnp.allclose(out3, ref_bf16, atol=5e-3, rtol=5e-3), "mismatch (bf16)"

    print("KERNEL_OK")
</pallas_src>

<mosaic_0001>
module attributes {stable_mosaic.version = 11 : i64} {
  func.func @kernel(%arg0: i32, %arg1: i32, %arg2: memref<8x16x384xf32, #tpu.memory_space<vmem>>, %arg3: memref<8x16xf32, #tpu.memory_space<vmem>>, %arg4: memref<8x16xf32, #tpu.memory_space<vmem>>, %arg5: memref<8x16x128xf32, #tpu.memory_space<vmem>>, %arg6: memref<8x16x128xf32, #tpu.memory_space<vmem>>) attributes {dimension_semantics = [#tpu.dimension_semantics<parallel>, #tpu.dimension_semantics<arbitrary>], iteration_bounds = array<i64: 2, 1>, scalar_prefetch = 0 : i64, scratch_operands = 2 : i64, tpu.core_type = #tpu.core_type<tc>, window_params = [{transform_indices = @transform_0, window_bounds = array<i64: 8, 16, 384>}, {transform_indices = @transform_1, window_bounds = array<i64: 8, 16>}, {transform_indices = @transform_2, window_bounds = array<i64: 8, 16>}]} {
    %c0_i32 = arith.constant 0 : i32
    %0 = arith.cmpi eq, %arg1, %c0_i32 : i32
    %1 = arith.extui %0 : i1 to i32
    %c0_i32_0 = arith.constant 0 : i32
    %2 = arith.cmpi ne, %1, %c0_i32_0 : i32
    scf.if %2 {
      %cst = arith.constant 0.000000e+00 : f32
      %9 = vector.broadcast %cst : f32 to vector<8x16x128xf32>
      %c0 = arith.constant 0 : index
      %c0_5 = arith.constant 0 : index
      %c0_6 = arith.constant 0 : index
      %10 = vector.load %arg5[%c0, %c0_5, %c0_6] : memref<8x16x128xf32, #tpu.memory_space<vmem>>, vector<8x16x128xf32>
      tpu.vector_store %arg5[%c0, %c0_5, %c0_6], %9 {strides = array<i32>} : memref<8x16x128xf32, #tpu.memory_space<vmem>>, vector<8x16x128xf32>,
      %cst_7 = arith.constant 0.000000e+00 : f32
      %11 = vector.broadcast %cst_7 : f32 to vector<8x16x128xf32>
      %c0_8 = arith.constant 0 : index
      %c0_9 = arith.constant 0 : index
      %c0_10 = arith.constant 0 : index
      %12 = vector.load %arg6[%c0_8, %c0_9, %c0_10] : memref<8x16x128xf32, #tpu.memory_space<vmem>>, vector<8x16x128xf32>
      tpu.vector_store %arg6[%c0_8, %c0_9, %c0_10], %11 {strides = array<i32>} : memref<8x16x128xf32, #tpu.memory_space<vmem>>, vector<8x16x128xf32>,
    } else {
    }
    %c0_i32_1 = arith.constant 0 : i32
    %3 = arith.cmpi eq, %arg1, %c0_i32_1 : i32
    %4 = arith.extui %3 : i1 to i32
    %c0_i32_2 = arith.constant 0 : i32
    %5 = arith.cmpi ne, %4, %c0_i32_2 : i32
    scf.if %5 {
      %c0 = arith.constant 0 : index
      %c0_5 = arith.constant 0 : index
      %c0_6 = arith.constant 0 : index
      %9 = vector.load %arg5[%c0, %c0_5, %c0_6] : memref<8x16x128xf32, #tpu.memory_space<vmem>>, vector<8x8x128xf32>
      %c0_7 = arith.constant 0 : index
      %c0_8 = arith.constant 0 : index
      %c0_9 = arith.constant 0 : index
      %10 = vector.load %arg6[%c0_7, %c0_8, %c0_9] : memref<8x16x128xf32, #tpu.memory_space<vmem>>, vector<8x8x128xf32>
      %c0_i32_10 = arith.constant 0 : i32
      %c128_i32 = arith.constant 128 : i32
      %11 = arith.muli %c0_i32_10, %c128_i32 : i32
      %12 = tpu.assume_multiple %11, 128 : i32
      %c0_11 = arith.constant 0 : index
      %c0_12 = arith.constant 0 : index
      %13 = arith.index_cast %12 : i32 to index
      %14 = vector.load %arg2[%c0_11, %c0_12, %13] : memref<8x16x384xf32, #tpu.memory_space<vmem>>, vector<8x8x128xf32>
      %15 = math.absf %14 : vector<8x8x128xf32>
      %16 = arith.addf %9, %15 : vector<8x8x128xf32>
      %17 = arith.maximumf %10, %15 : vector<8x8x128xf32>
      %c1_i32 = arith.constant 1 : i32
      %c128_i32_13 = arith.constant 128 : i32
      %18 = arith.muli %c1_i32, %c128_i32_13 : i32
      %19 = tpu.assume_multiple %18, 128 : i32
      %c0_14 = arith.constant 0 : index
      %c0_15 = arith.constant 0 : index
      %20 = arith.index_cast %19 : i32 to index
      %21 = vector.load %arg2[%c0_14, %c0_15, %20] : memref<8x16x384xf32, #tpu.memory_space<vmem>>, vector<8x8x128xf32>
      %22 = math.absf %21 : vector<8x8x128xf32>
      %23 = arith.addf %16, %22 : vector<8x8x128xf32>
      %24 = arith.maximumf %17, %22 : vector<8x8x128xf32>
      %c2_i32 = arith.constant 2 : i32
      %c0_16 = arith.constant 0 : index
      %c0_17 = arith.constant 0 : index
      %c256 = arith.constant 256 : index
      %25 = vector.load %arg2[%c0_16, %c0_17, %c256] : memref<8x16x384xf32, #tpu.memory_space<vmem>>, vector<8x8x128xf32>
      %26 = math.absf %25 : vector<8x8x128xf32>
      %27 = tpu.iota {dimensions = array<i32: 2>} : vector<8x8x128xi32>
      %c44_i32 = arith.constant 44 : i32
      %28 = vector.broadcast %c44_i32 : i32 to vector<8x8x128xi32>
      %29 = arith.cmpi slt, %27, %28 : vector<8x8x128xi32>
      %cst = arith.constant 0.000000e+00 : f32
      %30 = vector.broadcast %cst : f32 to vector<8x8x128xf32>
      %31 = arith.select %29, %26, %30 : vector<8x8x128xi1>, vector<8x8x128xf32>
      %32 = arith.addf %23, %31 : vector<8x8x128xf32>
      %33 = arith.maximumf %24, %31 : vector<8x8x128xf32>
      %c0_18 = arith.constant 0 : index
      %c0_19 = arith.constant 0 : index
      %c0_20 = arith.constant 0 : index
      %34 = vector.load %arg5[%c0_18, %c0_19, %c0_20] : memref<8x16x128xf32, #tpu.memory_space<vmem>>, vector<8x8x128xf32>
      tpu.vector_store %arg5[%c0_18, %c0_19, %c0_20], %32 {strides = array<i32>} : memref<8x16x128xf32, #tpu.memory_space<vmem>>, vector<8x8x128xf32>,
      %c0_21 = arith.constant 0 : index
      %c0_22 = arith.constant 0 : index
      %c0_23 = arith.constant 0 : index
      %35 = vector.load %arg6[%c0_21, %c0_22, %c0_23] : memref<8x16x128xf32, #tpu.memory_space<vmem>>, vector<8x8x128xf32>
      tpu.vector_store %arg6[%c0_21, %c0_22, %c0_23], %33 {strides = array<i32>} : memref<8x16x128xf32, #tpu.memory_space<vmem>>, vector<8x8x128xf32>,
      %c0_24 = arith.constant 0 : index
      %c8 = arith.constant 8 : index
      %c0_25 = arith.constant 0 : index
      %36 = vector.load %arg5[%c0_24, %c8, %c0_25] : memref<8x16x128xf32, #tpu.memory_space<vmem>>, vector<8x8x128xf32>
      %c0_26 = arith.constant 0 : index
      %c8_27 = arith.constant 8 : index
      %c0_28 = arith.constant 0 : index
      %37 = vector.load %arg6[%c0_26, %c8_27, %c0_28] : memref<8x16x128xf32, #tpu.memory_space<vmem>>, vector<8x8x128xf32>
      %c0_i32_29 = arith.constant 0 : i32
      %c128_i32_30 = arith.constant 128 : i32
      %38 = arith.muli %c0_i32_29, %c128_i32_30 : i32
      %39 = tpu.assume_multiple %38, 128 : i32
      %c0_31 = arith.constant 0 : index
      %c8_32 = arith.constant 8 : index
      %40 = arith.index_cast %39 : i32 to index
      %41 = vector.load %arg2[%c0_31, %c8_32, %40] : memref<8x16x384xf32, #tpu.memory_space<vmem>>, vector<8x8x128xf32>
      %42 = math.absf %41 : vector<8x8x128xf32>
      %43 = arith.addf %36, %42 : vector<8x8x128xf32>
      %44 = arith.maximumf %37, %42 : vector<8x8x128xf32>
      %c1_i32_33 = arith.constant 1 : i32
      %c128_i32_34 = arith.constant 128 : i32
      %45 = arith.muli %c1_i32_33, %c128_i32_34 : i32
      %46 = tpu.assume_multiple %45, 128 : i32
      %c0_35 = arith.constant 0 : index
      %c8_36 = arith.constant 8 : index
      %47 = arith.index_cast %46 : i32 to index
      %48 = vector.load %arg2[%c0_35, %c8_36, %47] : memref<8x16x384xf32, #tpu.memory_space<vmem>>, vector<8x8x128xf32>
      %49 = math.absf %48 : vector<8x8x128xf32>
      %50 = arith.addf %43, %49 : vector<8x8x128xf32>
      %51 = arith.maximumf %44, %49 : vector<8x8x128xf32>
      %c2_i32_37 = arith.constant 2 : i32
      %c0_38 = arith.constant 0 : index
      %c8_39 = arith.constant 8 : index
      %c256_40 = arith.constant 256 : index
      %52 = vector.load %arg2[%c0_38, %c8_39, %c256_40] : memref<8x16x384xf32, #tpu.memory_space<vmem>>, vector<8x8x128xf32>
      %53 = math.absf %52 : vector<8x8x128xf32>
      %54 = tpu.iota {dimensions = array<i32: 2>} : vector<8x8x128xi32>
      %c44_i32_41 = arith.constant 44 : i32
      %55 = vector.broadcast %c44_i32_41 : i32 to vector<8x8x128xi32>
      %56 = arith.cmpi slt, %54, %55 : vector<8x8x128xi32>
      %cst_42 = arith.constant 0.000000e+00 : f32
      %57 = vector.broadcast %cst_42 : f32 to vector<8x8x128xf32>
      %58 = arith.select %56, %53, %57 : vector<8x8x128xi1>, vector<8x8x128xf32>
      %59 = arith.addf %50, %58 : vector<8x8x128xf32>
      %60 = arith.maximumf %51, %58 : vector<8x8x128xf32>
      %c0_43 = arith.constant 0 : index
      %c8_44 = arith.constant 8 : index
      %c0_45 = arith.constant 0 : index
      %61 = vector.load %arg5[%c0_43, %c8_44, %c0_45] : memref<8x16x128xf32, #tpu.memory_space<vmem>>, vector<8x8x128xf32>
      tpu.vector_store %arg5[%c0_43, %c8_44, %c0_45], %59 {strides = array<i32>} : memref<8x16x128xf32, #tpu.memory_space<vmem>>, vector<8x8x128xf32>,
      %c0_46 = arith.constant 0 : index
      %c8_47 = arith.constant 8 : index
      %c0_48 = arith.constant 0 : index
      %62 = vector.load %arg6[%c0_46, %c8_47, %c0_48] : memref<8x16x128xf32, #tpu.memory_space<vmem>>, vector<8x8x128xf32>
      tpu.vector_store %arg6[%c0_46, %c8_47, %c0_48], %60 {strides = array<i32>} : memref<8x16x128xf32, #tpu.memory_space<vmem>>, vector<8x8x128xf32>,
    } else {
    }
    %c0_i32_3 = arith.constant 0 : i32
    %6 = arith.cmpi eq, %arg1, %c0_i32_3 : i32
    %7 = arith.extui %6 : i1 to i32
    %c0_i32_4 = arith.constant 0 : i32
    %8 = arith.cmpi ne, %7, %c0_i32_4 : i32
    scf.if %8 {
      %c0 = arith.constant 0 : index
      %c0_5 = arith.constant 0 : index
      %c0_6 = arith.constant 0 : index
      %9 = vector.load %arg5[%c0, %c0_5, %c0_6] : memref<8x16x128xf32, #tpu.memory_space<vmem>>, vector<8x16x128xf32>
      %cst = arith.constant dense<0.000000e+00> : vector<8x16xf32>
      %10 = vector.multi_reduction <add>, %9, %cst [2] : vector<8x16x128xf32> to vector<8x16xf32>
      %c0_7 = arith.constant 0 : index
      %c0_8 = arith.constant 0 : index
      %11 = vector.load %arg3[%c0_7, %c0_8] : memref<8x16xf32, #tpu.memory_space<vmem>>, vector<8x16xf32>
      tpu.vector_store %arg3[%c0_7, %c0_8], %10 {strides = array<i32>} : memref<8x16xf32, #tpu.memory_space<vmem>>, vector<8x16xf32>,
      %c0_9 = arith.constant 0 : index
      %c0_10 = arith.constant 0 : index
      %c0_11 = arith.constant 0 : index
      %12 = vector.load %arg6[%c0_9, %c0_10, %c0_11] : memref<8x16x128xf32, #tpu.memory_space<vmem>>, vector<8x16x128xf32>
      %cst_12 = arith.constant dense<0xFF800000> : vector<8x16xf32>
      %13 = vector.multi_reduction <maximumf>, %12, %cst_12 [2] : vector<8x16x128xf32> to vector<8x16xf32>
      %c0_13 = arith.constant 0 : index
      %c0_14 = arith.constant 0 : index
      %14 = vector.load %arg4[%c0_13, %c0_14] : memref<8x16xf32, #tpu.memory_space<vmem>>, vector<8x16xf32>
      tpu.vector_store %arg4[%c0_13, %c0_14], %13 {strides = array<i32>} : memref<8x16xf32, #tpu.memory_space<vmem>>, vector<8x16xf32>,
    } else {
    }
    return
  }
  func.func @transform_0(%arg0: i32, %arg1: i32) -> (i32, i32, i32) {
    %c0_i32 = arith.constant 0 : i32
    %c0_i32_0 = arith.constant 0 : i32
    return %arg0, %c0_i32, %arg1 : i32, i32, i32
  }
  func.func @transform_1(%arg0: i32, %arg1: i32) -> (i32, i32) {
    %c0_i32 = arith.constant 0 : i32
    %c0_i32_0 = arith.constant 0 : i32
    return %arg0, %c0_i32 : i32, i32
  }
  func.func @transform_2(%arg0: i32, %arg1: i32) -> (i32, i32) {
    %c0_i32 = arith.constant 0 : i32
    %c0_i32_0 = arith.constant 0 : i32
    return %arg0, %c0_i32 : i32, i32
  }
}

</mosaic_0001>

<llo_original>
// kernel: tpu_custom_call.1
$region0: #{tpu_custom_call.1}
  #allocation0 [shape = 'u32[]', space=smem, size = 0x4, offset = 0x4, fixed_abs, tag = 'smem constant byte address 0x4 - core index']
  #allocation1 [shape = 'u32[144,128]{1,0:T(1,128)}', space=vmem, size = 0x12000, scoped, tag = 'internal scratch']
  #allocation2 [shape = 'f32[8,16,128]{2,1,0:T(8,128)}', space=vmem, size = 0x10000, scoped, tag = 'scratch operand']
  #allocation3 [shape = 'f32[8,16,128]{2,1,0:T(8,128)}', space=vmem, size = 0x10000, scoped, tag = 'scratch operand']
  %s0 = inlined_call_operand.hbm [shape: f32[16,16,300], index: 0, kind: input, shape index: {}]
  %s1 = inlined_call_operand.hbm [shape: f32[16,16], index: 1, kind: output, shape index: {0}]
  %s2 = inlined_call_operand.hbm [shape: f32[16,16], index: 2, kind: output, shape index: {1}]
  %3 = xla_tuple %s1, %s2
  %s4 = sld [smem:[#allocation0]]
  $region53: #{tpu_custom_call.1} parent=0
    _
  %s6 = ssub.s32 1, %s4
  %s7 = scalar_select 0, %s6, %s4
  $region1: #{tpu_custom_call.1} parent=0
    #allocation4 [shape = 'u8[393216]{0}', space=vmem, size = 0x60000, scoped, tag = 'input window, operand 0']
    #allocation5 [shape = 's32[2]{0}', space=sflag, size = 0x8, scoped, tag = 'scoped memory for tpu_custom_call.1']
    #allocation6 [shape = 's32[2]{0}', space=sflag, size = 0x8, scoped, tag = 'scoped memory for tpu_custom_call.1']
    #allocation7 [shape = 'u8[8192]{0}', space=vmem, size = 0x2000, scoped, tag = 'output window, operand 0']
    #allocation8 [shape = 'u8[8192]{0}', space=vmem, size = 0x2000, scoped, tag = 'output window, operand 1']
    #allocation9 [shape = 's32[2]{0}', space=sflag, size = 0x8, scoped, tag = 'scoped memory for tpu_custom_call.1']
    %8 = vsyncpa [#allocation5], 0
    %s9 = scalar_lea.sflag [#allocation5], 1
    %10 = vsyncpa %s9, 0
    %11 = vsyncpa [#allocation6], 0
    %s12 = scalar_lea.sflag [#allocation6], 1
    %13 = vsyncpa %s12, 0
    %14 = vsyncpa [#allocation9], 0
    %s15 = scalar_lea.sflag [#allocation9], 1
    %16 = vsyncpa %s15, 0
    loop: start=0, step=1, limit=4
    $region2: #{tpu_custom_call.1} parent=1 // loop_pre_header
      _
    $region3: #{tpu_custom_call.1} parent=1 // loop_header
      %s18 = sphi 0, %s22
      %p19 = scmp.ge.s32.totalorder %s18, 4
      %s25 = sphi 0, %s37
      %s26 = sphi 0, %s33
      %s27 = sphi 0, %s25
      %s28 = sphi 0, %s26
      %s29 = sphi 0, %s27
      %s30 = sphi 0, %s28
      %s42 = sphi 0, %s44
      %s45 = sphi 0, %s42
      %s46 = sphi 0, %s45
      %s62 = sphi 0, %s46
      %s68 = sphi 0, %s70
      %s71 = sphi 0, %s68
      %s72 = sphi 0, %s71
      %s88 = sphi 0, %s72
      %s94 = sphi 0, %s96
      %s97 = sphi 0, %s94
      %s98 = sphi 0, %s97
      %s114 = sphi 0, %s98
    $region4: #{tpu_custom_call.1} parent=1 // loop_header_branch
      %21 = sbr.rel (%p19) target = $region8
    $region5: #{tpu_custom_call.1} parent=1 // loop_body
      %s23 = ssub.s32 %s18, 1
      %s24 = ssub.s32 %s18, 2
      %s31 = sadd.s32 1, %s26
      %p32 = scmp.ge.s32.totalorder %s31, 1
      %s33 = scalar_select %p32, 0, %s31
      %s34 = sadd.s32 1, %s25
      %s35 = scalar_select %p32, %s34, %s25
      %p36 = scmp.ge.s32.totalorder %s35, 2
      %s37 = scalar_select %p36, 0, %s35
      %s38 = ssub.s32 %s25, %s37
      %s39 = ssub.s32 %s26, %s33
      %s40 = sor.u32 %s38, %s39
      %p41 = scmp.eq.s32.totalorder %s40, 0
      %s43 = sadd.s32 %s42, 1
      %s44 = scalar_select %p41, %s42, %s43
      %p47 = pneg %p41
      %p48 = scmp.eq.s32.totalorder %s18, 1
      %p49 = por %p47, %p48
      %p50 = scmp.ne.s32.totalorder %s42, %s45
      %p51 = scmp.eq.s32.totalorder %s18, 0
      %p52 = por %p50, %p51
      %p53 = scmp.ne.s32.totalorder %s42, %s45
      %p54 = scmp.eq.s32.totalorder %s23, 1
      %p55 = por %p53, %p54
      %p56 = scmp.ne.s32.totalorder %s45, %s46
      %p57 = scmp.eq.s32.totalorder %s23, 0
      %p58 = por %p56, %p57
      %p59 = scmp.ne.s32.totalorder %s45, %s46
      %p60 = scmp.eq.s32.totalorder %s24, 1
      %p61 = por %p59, %p60
      %p63 = scmp.ne.s32.totalorder %s46, %s62
      %p64 = scmp.eq.s32.totalorder %s24, 0
      %p65 = por %p63, %p64
      %s66 = ssub.s32 %s25, %s37
      %p67 = scmp.eq.s32.totalorder %s66, 0
      %s69 = sadd.s32 %s68, 1
      %s70 = scalar_select %p67, %s68, %s69
      %p73 = pneg %p67
      %p74 = scmp.eq.s32.totalorder %s18, 1
      %p75 = por %p73, %p74
      %p76 = scmp.ne.s32.totalorder %s68, %s71
      %p77 = scmp.eq.s32.totalorder %s18, 0
      %p78 = por %p76, %p77
      %p79 = scmp.ne.s32.totalorder %s68, %s71
      %p80 = scmp.eq.s32.totalorder %s23, 1
      %p81 = por %p79, %p80
      %p82 = scmp.ne.s32.totalorder %s71, %s72
      %p83 = scmp.eq.s32.totalorder %s23, 0
      %p84 = por %p82, %p83
      %p85 = scmp.ne.s32.totalorder %s71, %s72
      %p86 = scmp.eq.s32.totalorder %s24, 1
      %p87 = por %p85, %p86
      %p89 = scmp.ne.s32.totalorder %s72, %s88
      %p90 = scmp.eq.s32.totalorder %s24, 0
      %p91 = por %p89, %p90
      %s92 = ssub.s32 %s25, %s37
      %p93 = scmp.eq.s32.totalorder %s92, 0
      %s95 = sadd.s32 %s94, 1
      %s96 = scalar_select %p93, %s94, %s95
      %p99 = pneg %p93
      %p100 = scmp.eq.s32.totalorder %s18, 1
      %p101 = por %p99, %p100
      %p102 = scmp.ne.s32.totalorder %s94, %s97
      %p103 = scmp.eq.s32.totalorder %s18, 0
      %p104 = por %p102, %p103
      %p105 = scmp.ne.s32.totalorder %s94, %s97
      %p106 = scmp.eq.s32.totalorder %s23, 1
      %p107 = por %p105, %p106
      %p108 = scmp.ne.s32.totalorder %s97, %s98
      %p109 = scmp.eq.s32.totalorder %s23, 0
      %p110 = por %p108, %p109
      %p111 = scmp.ne.s32.totalorder %s97, %s98
      %p112 = scmp.eq.s32.totalorder %s24, 1
      %p113 = por %p111, %p112
      %p115 = scmp.ne.s32.totalorder %s98, %s114
      %p116 = scmp.eq.s32.totalorder %s24, 0
      %p117 = por %p115, %p116
      %p118 = scmp.le.s32.totalorder 1, %s18
      %p119 = scmp.lt.s32.totalorder %s18, 3
      %p120 = pnand %p118, %p119
      %p121 = pneg %p120
      // Predicated region
      $region9: #{tpu_custom_call.1} parent=5 // pred_check
        _
      $region10: #{tpu_custom_call.1} parent=5 // pred_check_branch
        %123 = sbr.rel (%p120) target = $region12
      $region11: #{tpu_custom_call.1} parent=5 // pred_region
        %s124 = ssub.s32 %s18, 1
      $region12: #{tpu_custom_call.1} parent=5 // pred_fallthru
        _
      %p125 = scmp.lt.s32.totalorder %s18, 2
      // Predicated region
      $region13: #{tpu_custom_call.1} parent=5 // pred_check
        %p126 = pneg %p125
      $region14: #{tpu_custom_call.1} parent=5 // pred_check_branch
        %128 = sbr.rel (%p126) target = $region16
      $region15: #{tpu_custom_call.1} parent=5 // pred_region
        // Predicated region
        $region17: #{tpu_custom_call.1} parent=15 // pred_check
          %p129 = pneg %p52
        $region18: #{tpu_custom_call.1} parent=15 // pred_check_branch
          %131 = sbr.rel (%p129) target = $region20
        $region19: #{tpu_custom_call.1} parent=15 // pred_region
          %s132 = sand.u32 %s42, 1
          %s133 = scalar_lea.sflag [#allocation5], %s132
          %s134 = sand.u32 %s42, 1
          %s135 = smul.addr %s134, 384
          %s136 = scalar_lea.vmem [#allocation4], %s135
          %s137 = smul.u32 8, %s25
          %s138 = smul.u32 3, %s26
          %s140 = ssub.s32 6144, 6144
          %141 = vsyncadd %s133, %s140
          %s142 = smul.addr %s137, 6
          %s143 = sadd.s32 %s138, %s142
          %s144 = smul.addr %s143, 128
          %s145 = scalar_lea.hbm %s0, %s144
          %s146 = sshll.u32 %s136, 4
          %s147 = int_to_ptr.vmem [resolvable:$true] %s146
          %152 = dma.hbm_to_vmem [thread:$0]  %s145, 6144, %s147, %s133, 384, 384, 24
        $region20: #{tpu_custom_call.1} parent=15 // pred_fallthru
          _
      $region16: #{tpu_custom_call.1} parent=5 // pred_fallthru
        _
      %p153 = scmp.le.s32.totalorder 1, %s18
      %p154 = scmp.lt.s32.totalorder %s18, 3
      %p155 = pnand %p153, %p154
      %p156 = pneg %p155
      // Predicated region
      $region21: #{tpu_custom_call.1} parent=5 // pred_check
        _
      $region22: #{tpu_custom_call.1} parent=5 // pred_check_branch
        %158 = sbr.rel (%p155) target = $region24
      $region23: #{tpu_custom_call.1} parent=5 // pred_region
        %s159 = ssub.s32 %s18, 1
        %s160 = sand.u32 %s45, 1
        %s161 = scalar_lea.sflag [#allocation5], %s160
        %s162 = sand.u32 %s45, 1
        %s163 = smul.addr %s162, 384
        %s164 = scalar_lea.vmem [#allocation4], %s163
        // Predicated region
        $region25: #{tpu_custom_call.1} parent=23 // pred_check
          %p165 = pneg %p58
        $region26: #{tpu_custom_call.1} parent=23 // pred_check_branch
          %167 = sbr.rel (%p165) target = $region28
        $region27: #{tpu_custom_call.1} parent=23 // pred_region
          %168 = dma.done %s161, 6144
        $region28: #{tpu_custom_call.1} parent=23 // pred_fallthru
          _
        %s169 = sand.u32 %s45, 1
        %s170 = scalar_lea.sflag [#allocation5], %s169
        %s171 = sand.u32 %s45, 1
        %s172 = smul.addr %s171, 384
        %s173 = scalar_lea.vmem [#allocation4], %s172
        %p174 = pneg %p58
        %p175 = pneg %p55
        %p176 = pneg %p84
        %p177 = pneg %p81
        %s178 = sand.u32 %s71, 1
        %s179 = scalar_lea.sflag [#allocation6], %s178
        %s180 = sand.u32 %s71, 1
        %s181 = smul.addr %s180, 8
        %s182 = scalar_lea.vmem [#allocation7], %s181
        %p183 = pneg %p110
        %p184 = pneg %p107
        %s185 = sand.u32 %s97, 1
        %s186 = scalar_lea.sflag [#allocation9], %s185
        %s187 = sand.u32 %s97, 1
        %s188 = smul.addr %s187, 8
        %s189 = scalar_lea.vmem [#allocation8], %s188
        %s190 = smul.u32 8, %s27
        %s191 = smul.u32 3, %s28
        %p192 = scmp.eq.s32.totalorder %s28, 0
        // Predicated region
        $region29: #{tpu_custom_call.1} parent=23 // pred_check
          %p193 = pneg %p192
        $region30: #{tpu_custom_call.1} parent=23 // pred_check_branch
          %195 = sbr.rel (%p193) target = $region32
        $region31: #{tpu_custom_call.1} parent=23 // pred_region
          %196 = vst [vmem:[#allocation2] sm:$0xff] 0.0
          %197 = vst [vmem:[#allocation2 + $0x8] sm:$0xff] 0.0
          %198 = vst [vmem:[#allocation2 + $0x10] sm:$0xff] 0.0
          %199 = vst [vmem:[#allocation2 + $0x18] sm:$0xff] 0.0
          %200 = vst [vmem:[#allocation2 + $0x20] sm:$0xff] 0.0
          %201 = vst [vmem:[#allocation2 + $0x28] sm:$0xff] 0.0
          %202 = vst [vmem:[#allocation2 + $0x30] sm:$0xff] 0.0
          %203 = vst [vmem:[#allocation2 + $0x38] sm:$0xff] 0.0
          %204 = vst [vmem:[#allocation2 + $0x40] sm:$0xff] 0.0
          %205 = vst [vmem:[#allocation2 + $0x48] sm:$0xff] 0.0
          %206 = vst [vmem:[#allocation2 + $0x50] sm:$0xff] 0.0
          %207 = vst [vmem:[#allocation2 + $0x58] sm:$0xff] 0.0
          %208 = vst [vmem:[#allocation2 + $0x60] sm:$0xff] 0.0
          %209 = vst [vmem:[#allocation2 + $0x68] sm:$0xff] 0.0
          %210 = vst [vmem:[#allocation2 + $0x70] sm:$0xff] 0.0
          %211 = vst [vmem:[#allocation2 + $0x78] sm:$0xff] 0.0
          %212 = vst [vmem:[#allocation3] sm:$0xff] 0.0
          %213 = vst [vmem:[#allocation3 + $0x8] sm:$0xff] 0.0
          %214 = vst [vmem:[#allocation3 + $0x10] sm:$0xff] 0.0
          %215 = vst [vmem:[#allocation3 + $0x18] sm:$0xff] 0.0
          %216 = vst [vmem:[#allocation3 + $0x20] sm:$0xff] 0.0
          %217 = vst [vmem:[#allocation3 + $0x28] sm:$0xff] 0.0
          %218 = vst [vmem:[#allocation3 + $0x30] sm:$0xff] 0.0
          %219 = vst [vmem:[#allocation3 + $0x38] sm:$0xff] 0.0
          %220 = vst [vmem:[#allocation3 + $0x40] sm:$0xff] 0.0
          %221 = vst [vmem:[#allocation3 + $0x48] sm:$0xff] 0.0
          %222 = vst [vmem:[#allocation3 + $0x50] sm:$0xff] 0.0
          %223 = vst [vmem:[#allocation3 + $0x58] sm:$0xff] 0.0
          %224 = vst [vmem:[#allocation3 + $0x60] sm:$0xff] 0.0
          %225 = vst [vmem:[#allocation3 + $0x68] sm:$0xff] 0.0
          %226 = vst [vmem:[#allocation3 + $0x70] sm:$0xff] 0.0
          %227 = vst [vmem:[#allocation3 + $0x78] sm:$0xff] 0.0
          %v228 = vld [vmem:[#allocation2] sm:$0xff]
          %v229 = vld [vmem:[#allocation2 + $0x10] sm:$0xff]
          %v230 = vld [vmem:[#allocation2 + $0x20] sm:$0xff]
          %v231 = vld [vmem:[#allocation2 + $0x30] sm:$0xff]
          %v232 = vld [vmem:[#allocation2 + $0x40] sm:$0xff]
          %v233 = vld [vmem:[#allocation2 + $0x50] sm:$0xff]
          %v234 = vld [vmem:[#allocation2 + $0x60] sm:$0xff]
          %v235 = vld [vmem:[#allocation2 + $0x70] sm:$0xff]
          %v236 = vld [vmem:[#allocation3] sm:$0xff]
          %v237 = vld [vmem:[#allocation3 + $0x10] sm:$0xff]
          %v238 = vld [vmem:[#allocation3 + $0x20] sm:$0xff]
          %v239 = vld [vmem:[#allocation3 + $0x30] sm:$0xff]
          %v240 = vld [vmem:[#allocation3 + $0x40] sm:$0xff]
          %v241 = vld [vmem:[#allocation3 + $0x50] sm:$0xff]
          %v242 = vld [vmem:[#allocation3 + $0x60] sm:$0xff]
          %v243 = vld [vmem:[#allocation3 + $0x70] sm:$0xff]
          %v244 = vld [vmem:[%s164] sm:$0xff]
          %v245 = vld [vmem:[%s164 + $0x30] sm:$0xff]
          %v246 = vld [vmem:[%s164 + $0x60] sm:$0xff]
          %v247 = vld [vmem:[%s164 + $0x90] sm:$0xff]
          %v248 = vld [vmem:[%s164 + $0xc0] sm:$0xff]
          %v249 = vld [vmem:[%s164 + $0xf0] sm:$0xff]
          %v250 = vld [vmem:[%s164 + $0x120] sm:$0xff]
          %v251 = vld [vmem:[%s164 + $0x150] sm:$0xff]
          %v252 = vand.u32 2147483647, %v244
          %v253 = vand.u32 2147483647, %v245
          %v254 = vand.u32 2147483647, %v246
          %v255 = vand.u32 2147483647, %v247
          %v256 = vand.u32 2147483647, %v248
          %v257 = vand.u32 2147483647, %v249
          %v258 = vand.u32 2147483647, %v250
          %v259 = vand.u32 2147483647, %v251
          %v260 = vadd.f32 %v228, %v252
          %v261 = vadd.f32 %v229, %v253
          %v262 = vadd.f32 %v230, %v254
          %v263 = vadd.f32 %v231, %v255
          %v264 = vadd.f32 %v232, %v256
          %v265 = vadd.f32 %v233, %v257
          %v266 = vadd.f32 %v234, %v258
          %v267 = vadd.f32 %v235, %v259
          %v268 = vmax.f32 %v236, %v252
          %v269 = vmax.f32 %v237, %v253
          %v270 = vmax.f32 %v238, %v254
          %v271 = vmax.f32 %v239, %v255
          %v272 = vmax.f32 %v240, %v256
          %v273 = vmax.f32 %v241, %v257
          %v274 = vmax.f32 %v242, %v258
          %v275 = vmax.f32 %v243, %v259
          %s276 = scalar_lea.vmem %s164, 8 [#allocation4]
          %v277 = vld [vmem:[%s276] sm:$0xff]
          %v278 = vld [vmem:[%s276 + $0x30] sm:$0xff]
          %v279 = vld [vmem:[%s276 + $0x60] sm:$0xff]
          %v280 = vld [vmem:[%s276 + $0x90] sm:$0xff]
          %v281 = vld [vmem:[%s276 + $0xc0] sm:$0xff]
          %v282 = vld [vmem:[%s276 + $0xf0] sm:$0xff]
          %v283 = vld [vmem:[%s276 + $0x120] sm:$0xff]
          %v284 = vld [vmem:[%s276 + $0x150] sm:$0xff]
          %v285 = vand.u32 2147483647, %v277
          %v286 = vand.u32 2147483647, %v278
          %v287 = vand.u32 2147483647, %v279
          %v288 = vand.u32 2147483647, %v280
          %v289 = vand.u32 2147483647, %v281
          %v290 = vand.u32 2147483647, %v282
          %v291 = vand.u32 2147483647, %v283
          %v292 = vand.u32 2147483647, %v284
          %v293 = vadd.f32 %v260, %v285
          %v294 = vadd.f32 %v261, %v286
          %v295 = vadd.f32 %v262, %v287
          %v296 = vadd.f32 %v263, %v288
          %v297 = vadd.f32 %v264, %v289
          %v298 = vadd.f32 %v265, %v290
          %v299 = vadd.f32 %v266, %v291
          %v300 = vadd.f32 %v267, %v292
          %v301 = vmax.f32 %v268, %v285
          %v302 = vmax.f32 %v269, %v286
          %v303 = vmax.f32 %v270, %v287
          %v304 = vmax.f32 %v271, %v288
          %v305 = vmax.f32 %v272, %v289
          %v306 = vmax.f32 %v273, %v290
          %v307 = vmax.f32 %v274, %v291
          %v308 = vmax.f32 %v275, %v292
          %v309 = vld [vmem:[%s164 + $0x10] sm:$0xff]
          %v310 = vld [vmem:[%s164 + $0x40] sm:$0xff]
          %v311 = vld [vmem:[%s164 + $0x70] sm:$0xff]
          %v312 = vld [vmem:[%s164 + $0xa0] sm:$0xff]
          %v313 = vld [vmem:[%s164 + $0xd0] sm:$0xff]
          %v314 = vld [vmem:[%s164 + $0x100] sm:$0xff]
          %v315 = vld [vmem:[%s164 + $0x130] sm:$0xff]
          %v316 = vld [vmem:[%s164 + $0x160] sm:$0xff]
          %v317 = vand.u32 2147483647, %v309
          %v318 = vand.u32 2147483647, %v310
          %v319 = vand.u32 2147483647, %v311
          %v320 = vand.u32 2147483647, %v312
          %v321 = vand.u32 2147483647, %v313
          %v322 = vand.u32 2147483647, %v314
          %v323 = vand.u32 2147483647, %v315
          %v324 = vand.u32 2147483647, %v316
          %v325 = vlaneseq
          %v326 = vand.u32 %v325, 127
          %vm327 = vcmp.lt.s32.totalorder %v326, 44
          %v328 = vsel %vm327, %v317, 0.0
          %v329 = vsel %vm327, %v318, 0.0
          %v330 = vsel %vm327, %v319, 0.0
          %v331 = vsel %vm327, %v320, 0.0
          %v332 = vsel %vm327, %v321, 0.0
          %v333 = vsel %vm327, %v322, 0.0
          %v334 = vsel %vm327, %v323, 0.0
          %v335 = vsel %vm327, %v324, 0.0
          %v336 = vadd.f32 %v293, %v328
          %v337 = vadd.f32 %v294, %v329
          %v338 = vadd.f32 %v295, %v330
          %v339 = vadd.f32 %v296, %v331
          %v340 = vadd.f32 %v297, %v332
          %v341 = vadd.f32 %v298, %v333
          %v342 = vadd.f32 %v299, %v334
          %v343 = vadd.f32 %v300, %v335
          %v344 = vmax.f32 %v301, %v328
          %v345 = vmax.f32 %v302, %v329
          %v346 = vmax.f32 %v303, %v330
          %v347 = vmax.f32 %v304, %v331
          %v348 = vmax.f32 %v305, %v332
          %v349 = vmax.f32 %v306, %v333
          %v350 = vmax.f32 %v307, %v334
          %v351 = vmax.f32 %v308, %v335
          %352 = vst [vmem:[#allocation2] sm:$0xff] %v336
          %353 = vst [vmem:[#allocation2 + $0x10] sm:$0xff] %v337
          %354 = vst [vmem:[#allocation2 + $0x20] sm:$0xff] %v338
          %355 = vst [vmem:[#allocation2 + $0x30] sm:$0xff] %v339
          %356 = vst [vmem:[#allocation2 + $0x40] sm:$0xff] %v340
          %357 = vst [vmem:[#allocation2 + $0x50] sm:$0xff] %v341
          %358 = vst [vmem:[#allocation2 + $0x60] sm:$0xff] %v342
          %359 = vst [vmem:[#allocation2 + $0x70] sm:$0xff] %v343
          %360 = vst [vmem:[#allocation3] sm:$0xff] %v344
          %361 = vst [vmem:[#allocation3 + $0x10] sm:$0xff] %v345
          %362 = vst [vmem:[#allocation3 + $0x20] sm:$0xff] %v346
          %363 = vst [vmem:[#allocation3 + $0x30] sm:$0xff] %v347
          %364 = vst [vmem:[#allocation3 + $0x40] sm:$0xff] %v348
          %365 = vst [vmem:[#allocation3 + $0x50] sm:$0xff] %v349
          %366 = vst [vmem:[#allocation3 + $0x60] sm:$0xff] %v350
          %367 = vst [vmem:[#allocation3 + $0x70] sm:$0xff] %v351
          %v368 = vld [vmem:[#allocation2 + $0x8] sm:$0xff]
          %v369 = vld [vmem:[#allocation2 + $0x18] sm:$0xff]
          %v370 = vld [vmem:[#allocation2 + $0x28] sm:$0xff]
          %v371 = vld [vmem:[#allocation2 + $0x38] sm:$0xff]
          %v372 = vld [vmem:[#allocation2 + $0x48] sm:$0xff]
          %v373 = vld [vmem:[#allocation2 + $0x58] sm:$0xff]
          %v374 = vld [vmem:[#allocation2 + $0x68] sm:$0xff]
          %v375 = vld [vmem:[#allocation2 + $0x78] sm:$0xff]
          %v376 = vld [vmem:[#allocation3 + $0x8] sm:$0xff]
          %v377 = vld [vmem:[#allocation3 + $0x18] sm:$0xff]
          %v378 = vld [vmem:[#allocation3 + $0x28] sm:$0xff]
          %v379 = vld [vmem:[#allocation3 + $0x38] sm:$0xff]
          %v380 = vld [vmem:[#allocation3 + $0x48] sm:$0xff]
          %v381 = vld [vmem:[#allocation3 + $0x58] sm:$0xff]
          %v382 = vld [vmem:[#allocation3 + $0x68] sm:$0xff]
          %v383 = vld [vmem:[#allocation3 + $0x78] sm:$0xff]
          %v384 = vld [vmem:[%s164 + $0x18] sm:$0xff]
          %v385 = vld [vmem:[%s164 + $0x48] sm:$0xff]
          %v386 = vld [vmem:[%s164 + $0x78] sm:$0xff]
          %v387 = vld [vmem:[%s164 + $0xa8] sm:$0xff]
          %v388 = vld [vmem:[%s164 + $0xd8] sm:$0xff]
          %v389 = vld [vmem:[%s164 + $0x108] sm:$0xff]
          %v390 = vld [vmem:[%s164 + $0x138] sm:$0xff]
          %v391 = vld [vmem:[%s164 + $0x168] sm:$0xff]
          %v392 = vand.u32 2147483647, %v384
          %v393 = vand.u32 2147483647, %v385
          %v394 = vand.u32 2147483647, %v386
          %v395 = vand.u32 2147483647, %v387
          %v396 = vand.u32 2147483647, %v388
          %v397 = vand.u32 2147483647, %v389
          %v398 = vand.u32 2147483647, %v390
          %v399 = vand.u32 2147483647, %v391
          %v400 = vadd.f32 %v368, %v392
          %v401 = vadd.f32 %v369, %v393
          %v402 = vadd.f32 %v370, %v394
          %v403 = vadd.f32 %v371, %v395
          %v404 = vadd.f32 %v372, %v396
          %v405 = vadd.f32 %v373, %v397
          %v406 = vadd.f32 %v374, %v398
          %v407 = vadd.f32 %v375, %v399
          %v408 = vmax.f32 %v376, %v392
          %v409 = vmax.f32 %v377, %v393
          %v410 = vmax.f32 %v378, %v394
          %v411 = vmax.f32 %v379, %v395
          %v412 = vmax.f32 %v380, %v396
          %v413 = vmax.f32 %v381, %v397
          %v414 = vmax.f32 %v382, %v398
          %v415 = vmax.f32 %v383, %v399
          %v416 = vld [vmem:[%s276 + $0x18] sm:$0xff]
          %v417 = vld [vmem:[%s276 + $0x48] sm:$0xff]
          %v418 = vld [vmem:[%s276 + $0x78] sm:$0xff]
          %v419 = vld [vmem:[%s276 + $0xa8] sm:$0xff]
          %v420 = vld [vmem:[%s276 + $0xd8] sm:$0xff]
          %v421 = vld [vmem:[%s276 + $0x108] sm:$0xff]
          %v422 = vld [vmem:[%s276 + $0x138] sm:$0xff]
          %v423 = vld [vmem:[%s276 + $0x168] sm:$0xff]
          %v424 = vand.u32 2147483647, %v416
          %v425 = vand.u32 2147483647, %v417
          %v426 = vand.u32 2147483647, %v418
          %v427 = vand.u32 2147483647, %v419
          %v428 = vand.u32 2147483647, %v420
          %v429 = vand.u32 2147483647, %v421
          %v430 = vand.u32 2147483647, %v422
          %v431 = vand.u32 2147483647, %v423
          %v432 = vadd.f32 %v400, %v424
          %v433 = vadd.f32 %v401, %v425
          %v434 = vadd.f32 %v402, %v426
          %v435 = vadd.f32 %v403, %v427
          %v436 = vadd.f32 %v404, %v428
          %v437 = vadd.f32 %v405, %v429
          %v438 = vadd.f32 %v406, %v430
          %v439 = vadd.f32 %v407, %v431
          %v440 = vmax.f32 %v408, %v424
          %v441 = vmax.f32 %v409, %v425
          %v442 = vmax.f32 %v410, %v426
          %v443 = vmax.f32 %v411, %v427
          %v444 = vmax.f32 %v412, %v428
          %v445 = vmax.f32 %v413, %v429
          %v446 = vmax.f32 %v414, %v430
          %v447 = vmax.f32 %v415, %v431
          %v448 = vld [vmem:[%s164 + $0x28] sm:$0xff]
          %v449 = vld [vmem:[%s164 + $0x58] sm:$0xff]
          %v450 = vld [vmem:[%s164 + $0x88] sm:$0xff]
          %v451 = vld [vmem:[%s164 + $0xb8] sm:$0xff]
          %v452 = vld [vmem:[%s164 + $0xe8] sm:$0xff]
          %v453 = vld [vmem:[%s164 + $0x118] sm:$0xff]
          %v454 = vld [vmem:[%s164 + $0x148] sm:$0xff]
          %v455 = vld [vmem:[%s164 + $0x178] sm:$0xff]
          %v456 = vand.u32 2147483647, %v448
          %v457 = vand.u32 2147483647, %v449
          %v458 = vand.u32 2147483647, %v450
          %v459 = vand.u32 2147483647, %v451
          %v460 = vand.u32 2147483647, %v452
          %v461 = vand.u32 2147483647, %v453
          %v462 = vand.u32 2147483647, %v454
          %v463 = vand.u32 2147483647, %v455
          %v464 = vsel %vm327, %v456, 0.0
          %v465 = vsel %vm327, %v457, 0.0
          %v466 = vsel %vm327, %v458, 0.0
          %v467 = vsel %vm327, %v459, 0.0
          %v468 = vsel %vm327, %v460, 0.0
          %v469 = vsel %vm327, %v461, 0.0
          %v470 = vsel %vm327, %v462, 0.0
          %v471 = vsel %vm327, %v463, 0.0
          %v472 = vadd.f32 %v432, %v464
          %v473 = vadd.f32 %v433, %v465
          %v474 = vadd.f32 %v434, %v466
          %v475 = vadd.f32 %v435, %v467
          %v476 = vadd.f32 %v436, %v468
          %v477 = vadd.f32 %v437, %v469
          %v478 = vadd.f32 %v438, %v470
          %v479 = vadd.f32 %v439, %v471
          %v480 = vmax.f32 %v440, %v464
          %v481 = vmax.f32 %v441, %v465
          %v482 = vmax.f32 %v442, %v466
          %v483 = vmax.f32 %v443, %v467
          %v484 = vmax.f32 %v444, %v468
          %v485 = vmax.f32 %v445, %v469
          %v486 = vmax.f32 %v446, %v470
          %v487 = vmax.f32 %v447, %v471
          %488 = vst [vmem:[#allocation2 + $0x8] sm:$0xff] %v472
          %489 = vst [vmem:[#allocation2 + $0x18] sm:$0xff] %v473
          %490 = vst [vmem:[#allocation2 + $0x28] sm:$0xff] %v474
          %491 = vst [vmem:[#allocation2 + $0x38] sm:$0xff] %v475
          %492 = vst [vmem:[#allocation2 + $0x48] sm:$0xff] %v476
          %493 = vst [vmem:[#allocation2 + $0x58] sm:$0xff] %v477
          %494 = vst [vmem:[#allocation2 + $0x68] sm:$0xff] %v478
          %495 = vst [vmem:[#allocation2 + $0x78] sm:$0xff] %v479
          %496 = vst [vmem:[#allocation3 + $0x8] sm:$0xff] %v480
          %497 = vst [vmem:[#allocation3 + $0x18] sm:$0xff] %v481
          %498 = vst [vmem:[#allocation3 + $0x28] sm:$0xff] %v482
          %499 = vst [vmem:[#allocation3 + $0x38] sm:$0xff] %v483
          %500 = vst [vmem:[#allocation3 + $0x48] sm:$0xff] %v484
          %501 = vst [vmem:[#allocation3 + $0x58] sm:$0xff] %v485
          %502 = vst [vmem:[#allocation3 + $0x68] sm:$0xff] %v486
          %503 = vst [vmem:[#allocation3 + $0x78] sm:$0xff] %v487
          %v504 = vld [vmem:[#allocation2] sm:$0xff]
          %v505 = vld [vmem:[#allocation2 + $0x8] sm:$0xff]
          %v506 = vld [vmem:[#allocation2 + $0x10] sm:$0xff]
          %v507 = vld [vmem:[#allocation2 + $0x18] sm:$0xff]
          %v508 = vld [vmem:[#allocation2 + $0x20] sm:$0xff]
          %v509 = vld [vmem:[#allocation2 + $0x28] sm:$0xff]
          %v510 = vld [vmem:[#allocation2 + $0x30] sm:$0xff]
          %v511 = vld [vmem:[#allocation2 + $0x38] sm:$0xff]
          %v512 = vld [vmem:[#allocation2 + $0x40] sm:$0xff]
          %v513 = vld [vmem:[#allocation2 + $0x48] sm:$0xff]
          %v514 = vld [vmem:[#allocation2 + $0x50] sm:$0xff]
          %v515 = vld [vmem:[#allocation2 + $0x58] sm:$0xff]
          %v516 = vld [vmem:[#allocation2 + $0x60] sm:$0xff]
          %v517 = vld [vmem:[#allocation2 + $0x68] sm:$0xff]
          %v518 = vld [vmem:[#allocation2 + $0x70] sm:$0xff]
          %v519 = vld [vmem:[#allocation2 + $0x78] sm:$0xff]
          %520 = vadd.xlane.f32.xlu0 %v504
          %v521 = vpop.xlane.xlu0 %520
          %522 = vadd.xlane.f32.xlu0 %v505
          %v523 = vpop.xlane.xlu0 %522
          %524 = vadd.xlane.f32.xlu0 %v506
          %v525 = vpop.xlane.xlu0 %524
          %526 = vadd.xlane.f32.xlu0 %v507
          %v527 = vpop.xlane.xlu0 %526
          %528 = vadd.xlane.f32.xlu0 %v508
          %v529 = vpop.xlane.xlu0 %528
          %530 = vadd.xlane.f32.xlu0 %v509
          %v531 = vpop.xlane.xlu0 %530
          %532 = vadd.xlane.f32.xlu0 %v510
          %v533 = vpop.xlane.xlu0 %532
          %534 = vadd.xlane.f32.xlu0 %v511
          %v535 = vpop.xlane.xlu0 %534
          %536 = vadd.xlane.f32.xlu0 %v512
          %v537 = vpop.xlane.xlu0 %536
          %538 = vadd.xlane.f32.xlu0 %v513
          %v539 = vpop.xlane.xlu0 %538
          %540 = vadd.xlane.f32.xlu0 %v514
          %v541 = vpop.xlane.xlu0 %540
          %542 = vadd.xlane.f32.xlu0 %v515
          %v543 = vpop.xlane.xlu0 %542
          %544 = vadd.xlane.f32.xlu0 %v516
          %v545 = vpop.xlane.xlu0 %544
          %546 = vadd.xlane.f32.xlu0 %v517
          %v547 = vpop.xlane.xlu0 %546
          %548 = vadd.xlane.f32.xlu0 %v518
          %v549 = vpop.xlane.xlu0 %548
          %550 = vadd.xlane.f32.xlu0 %v519
          %v551 = vpop.xlane.xlu0 %550
          %v568 = vlaneseq
          %v569 = vshrl.u32 %v568, 7
          %v570 = vsub.s32 %v326, %v569
          %v571 = vrot.slane %v521, %v570
          %v572 = vadd.s32 %v326, 4294967288
          %v573 = vlaneseq
          %v574 = vshrl.u32 %v573, 7
          %v575 = vsub.s32 %v572, %v574
          %v576 = vrot.slane %v523, %v575
          %vm577 = vcmask 130112
          %v578 = vsel %vm577, %v576, %v571
          %v579 = vlaneseq
          %v580 = vshrl.u32 %v579, 7
          %v581 = vsub.s32 %v326, %v580
          %v582 = vrot.slane %v525, %v581
          %v583 = vlaneseq
          %v584 = vshrl.u32 %v583, 7
          %v585 = vsub.s32 %v572, %v584
          %v586 = vrot.slane %v527, %v585
          %v587 = vsel %vm577, %v586, %v582
          %v588 = vlaneseq
          %v589 = vshrl.u32 %v588, 7
          %v590 = vsub.s32 %v326, %v589
          %v591 = vrot.slane %v529, %v590
          %v592 = vlaneseq
          %v593 = vshrl.u32 %v592, 7
          %v594 = vsub.s32 %v572, %v593
          %v595 = vrot.slane %v531, %v594
          %v596 = vsel %vm577, %v595, %v591
          %v597 = vlaneseq
          %v598 = vshrl.u32 %v597, 7
          %v599 = vsub.s32 %v326, %v598
          %v600 = vrot.slane %v533, %v599
          %v601 = vlaneseq
          %v602 = vshrl.u32 %v601, 7
          %v603 = vsub.s32 %v572, %v602
          %v604 = vrot.slane %v535, %v603
          %v605 = vsel %vm577, %v604, %v600
          %v606 = vlaneseq
          %v607 = vshrl.u32 %v606, 7
          %v608 = vsub.s32 %v326, %v607
          %v609 = vrot.slane %v537, %v608
          %v610 = vlaneseq
          %v611 = vshrl.u32 %v610, 7
          %v612 = vsub.s32 %v572, %v611
          %v613 = vrot.slane %v539, %v612
          %v614 = vsel %vm577, %v613, %v609
          %v615 = vlaneseq
          %v616 = vshrl.u32 %v615, 7
          %v617 = vsub.s32 %v326, %v616
          %v618 = vrot.slane %v541, %v617
          %v619 = vlaneseq
          %v620 = vshrl.u32 %v619, 7
          %v621 = vsub.s32 %v572, %v620
          %v622 = vrot.slane %v543, %v621
          %v623 = vsel %vm577, %v622, %v618
          %v624 = vlaneseq
          %v625 = vshrl.u32 %v624, 7
          %v626 = vsub.s32 %v326, %v625
          %v627 = vrot.slane %v545, %v626
          %v628 = vlaneseq
          %v629 = vshrl.u32 %v628, 7
          %v630 = vsub.s32 %v572, %v629
          %v631 = vrot.slane %v547, %v630
          %v632 = vsel %vm577, %v631, %v627
          %v633 = vlaneseq
          %v634 = vshrl.u32 %v633, 7
          %v635 = vsub.s32 %v326, %v634
          %v636 = vrot.slane %v549, %v635
          %v637 = vlaneseq
          %v638 = vshrl.u32 %v637, 7
          %v639 = vsub.s32 %v572, %v638
          %v640 = vrot.slane %v551, %v639
          %v641 = vsel %vm577, %v640, %v636
          %vm642 = vcmask 1041409
          %v643 = vsel %vm642, %v587, %v578
          %vm644 = vcmask 1042434
          %v645 = vsel %vm644, %v596, %v643
          %vm646 = vcmask 1043459
          %v647 = vsel %vm646, %v605, %v645
          %vm648 = vcmask 1044484
          %v649 = vsel %vm648, %v614, %v647
          %vm650 = vcmask 1045509
          %v651 = vsel %vm650, %v623, %v649
          %vm652 = vcmask 1046534
          %v653 = vsel %vm652, %v632, %v651
          %vm654 = vcmask 1047559
          %v655 = vsel %vm654, %v641, %v653
          %vm657 = vcmask 130048
          %658 = vst.msk [vmem:[%s182] sm:$0xff] %vm657, %v655
          %v659 = vld [vmem:[#allocation3] sm:$0xff]
          %v660 = vld [vmem:[#allocation3 + $0x8] sm:$0xff]
          %v661 = vld [vmem:[#allocation3 + $0x10] sm:$0xff]
          %v662 = vld [vmem:[#allocation3 + $0x18] sm:$0xff]
          %v663 = vld [vmem:[#allocation3 + $0x20] sm:$0xff]
          %v664 = vld [vmem:[#allocation3 + $0x28] sm:$0xff]
          %v665 = vld [vmem:[#allocation3 + $0x30] sm:$0xff]
          %v666 = vld [vmem:[#allocation3 + $0x38] sm:$0xff]
          %v667 = vld [vmem:[#allocation3 + $0x40] sm:$0xff]
          %v668 = vld [vmem:[#allocation3 + $0x48] sm:$0xff]
          %v669 = vld [vmem:[#allocation3 + $0x50] sm:$0xff]
          %v670 = vld [vmem:[#allocation3 + $0x58] sm:$0xff]
          %v671 = vld [vmem:[#allocation3 + $0x60] sm:$0xff]
          %v672 = vld [vmem:[#allocation3 + $0x68] sm:$0xff]
          %v673 = vld [vmem:[#allocation3 + $0x70] sm:$0xff]
          %v674 = vld [vmem:[#allocation3 + $0x78] sm:$0xff]
          %675 = vmax.xlane.f32.xlu0 %v659
          %v676 = vpop.xlane.xlu0 %675
          %677 = vmax.xlane.f32.xlu0 %v660
          %v678 = vpop.xlane.xlu0 %677
          %679 = vmax.xlane.f32.xlu0 %v661
          %v680 = vpop.xlane.xlu0 %679
          %681 = vmax.xlane.f32.xlu0 %v662
          %v682 = vpop.xlane.xlu0 %681
          %683 = vmax.xlane.f32.xlu0 %v663
          %v684 = vpop.xlane.xlu0 %683
          %685 = vmax.xlane.f32.xlu0 %v664
          %v686 = vpop.xlane.xlu0 %685
          %687 = vmax.xlane.f32.xlu0 %v665
          %v688 = vpop.xlane.xlu0 %687
          %689 = vmax.xlane.f32.xlu0 %v666
          %v690 = vpop.xlane.xlu0 %689
          %691 = vmax.xlane.f32.xlu0 %v667
          %v692 = vpop.xlane.xlu0 %691
          %693 = vmax.xlane.f32.xlu0 %v668
          %v694 = vpop.xlane.xlu0 %693
          %695 = vmax.xlane.f32.xlu0 %v669
          %v696 = vpop.xlane.xlu0 %695
          %697 = vmax.xlane.f32.xlu0 %v670
          %v698 = vpop.xlane.xlu0 %697
          %699 = vmax.xlane.f32.xlu0 %v671
          %v700 = vpop.xlane.xlu0 %699
          %701 = vmax.xlane.f32.xlu0 %v672
          %v702 = vpop.xlane.xlu0 %701
          %703 = vmax.xlane.f32.xlu0 %v673
          %v704 = vpop.xlane.xlu0 %703
          %705 = vmax.xlane.f32.xlu0 %v674
          %v706 = vpop.xlane.xlu0 %705
          %v723 = vlaneseq
          %v724 = vshrl.u32 %v723, 7
          %v725 = vsub.s32 %v326, %v724
          %v726 = vrot.slane %v676, %v725
          %v727 = vlaneseq
          %v728 = vshrl.u32 %v727, 7
          %v729 = vsub.s32 %v572, %v728
          %v730 = vrot.slane %v678, %v729
          %v731 = vsel %vm577, %v730, %v726
          %v732 = vlaneseq
          %v733 = vshrl.u32 %v732, 7
          %v734 = vsub.s32 %v326, %v733
          %v735 = vrot.slane %v680, %v734
          %v736 = vlaneseq
          %v737 = vshrl.u32 %v736, 7
          %v738 = vsub.s32 %v572, %v737
          %v739 = vrot.slane %v682, %v738
          %v740 = vsel %vm577, %v739, %v735
          %v741 = vlaneseq
          %v742 = vshrl.u32 %v741, 7
          %v743 = vsub.s32 %v326, %v742
          %v744 = vrot.slane %v684, %v743
          %v745 = vlaneseq
          %v746 = vshrl.u32 %v745, 7
          %v747 = vsub.s32 %v572, %v746
          %v748 = vrot.slane %v686, %v747
          %v749 = vsel %vm577, %v748, %v744
          %v750 = vlaneseq
          %v751 = vshrl.u32 %v750, 7
          %v752 = vsub.s32 %v326, %v751
          %v753 = vrot.slane %v688, %v752
          %v754 = vlaneseq
          %v755 = vshrl.u32 %v754, 7
          %v756 = vsub.s32 %v572, %v755
          %v757 = vrot.slane %v690, %v756
          %v758 = vsel %vm577, %v757, %v753
          %v759 = vlaneseq
          %v760 = vshrl.u32 %v759, 7
          %v761 = vsub.s32 %v326, %v760
          %v762 = vrot.slane %v692, %v761
          %v763 = vlaneseq
          %v764 = vshrl.u32 %v763, 7
          %v765 = vsub.s32 %v572, %v764
          %v766 = vrot.slane %v694, %v765
          %v767 = vsel %vm577, %v766, %v762
          %v768 = vlaneseq
          %v769 = vshrl.u32 %v768, 7
          %v770 = vsub.s32 %v326, %v769
          %v771 = vrot.slane %v696, %v770
          %v772 = vlaneseq
          %v773 = vshrl.u32 %v772, 7
          %v774 = vsub.s32 %v572, %v773
          %v775 = vrot.slane %v698, %v774
          %v776 = vsel %vm577, %v775, %v771
          %v777 = vlaneseq
          %v778 = vshrl.u32 %v777, 7
          %v779 = vsub.s32 %v326, %v778
          %v780 = vrot.slane %v700, %v779
          %v781 = vlaneseq
          %v782 = vshrl.u32 %v781, 7
          %v783 = vsub.s32 %v572, %v782
          %v784 = vrot.slane %v702, %v783
          %v785 = vsel %vm577, %v784, %v780
          %v786 = vlaneseq
          %v787 = vshrl.u32 %v786, 7
          %v788 = vsub.s32 %v326, %v787
          %v789 = vrot.slane %v704, %v788
          %v790 = vlaneseq
          %v791 = vshrl.u32 %v790, 7
          %v792 = vsub.s32 %v572, %v791
          %v793 = vrot.slane %v706, %v792
          %v794 = vsel %vm577, %v793, %v789
          %v795 = vsel %vm642, %v740, %v731
          %v796 = vsel %vm644, %v749, %v795
          %v797 = vsel %vm646, %v758, %v796
          %v798 = vsel %vm648, %v767, %v797
          %v799 = vsel %vm650, %v776, %v798
          %v800 = vsel %vm652, %v785, %v799
          %v801 = vsel %vm654, %v794, %v800
          %803 = vst.msk [vmem:[%s189] sm:$0xff] %vm657, %v801
        $region32: #{tpu_custom_call.1} parent=23 // pred_fallthru
          _
        %s804 = sand.u32 %s71, 1
        %s805 = scalar_lea.sflag [#allocation6], %s804
        %s806 = sand.u32 %s71, 1
        %s807 = smul.addr %s806, 8
        %s808 = scalar_lea.vmem [#allocation7], %s807
        %s809 = sand.u32 %s97, 1
        %s810 = scalar_lea.sflag [#allocation9], %s809
        %s811 = sand.u32 %s97, 1
        %s812 = smul.addr %s811, 8
        %s813 = scalar_lea.vmem [#allocation8], %s812
        // Predicated region
        $region33: #{tpu_custom_call.1} parent=23 // pred_check
          %p814 = pneg %p81
        $region34: #{tpu_custom_call.1} parent=23 // pred_check_branch
          %816 = sbr.rel (%p814) target = $region36
        $region35: #{tpu_custom_call.1} parent=23 // pred_region
          %s818 = ssub.s32 128, 128
          %819 = vsyncadd %s805, %s818
          %s820 = smul.addr %s27, 128
          %s821 = scalar_lea.hbm %s1, %s820
          %s823 = sshll.u32 %s808, 4
          %s824 = int_to_ptr.vmem [resolvable:$true] %s823
          %826 = dma.vmem_to_hbm [thread:$0]  %s824, 128, %s821, %s805
        $region36: #{tpu_custom_call.1} parent=23 // pred_fallthru
          _
        // Predicated region
        $region37: #{tpu_custom_call.1} parent=23 // pred_check
          %p827 = pneg %p107
        $region38: #{tpu_custom_call.1} parent=23 // pred_check_branch
          %829 = sbr.rel (%p827) target = $region40
        $region39: #{tpu_custom_call.1} parent=23 // pred_region
          %s831 = ssub.s32 128, 128
          %832 = vsyncadd %s810, %s831
          %s833 = smul.addr %s27, 128
          %s834 = scalar_lea.hbm %s2, %s833
          %s836 = sshll.u32 %s813, 4
          %s837 = int_to_ptr.vmem [resolvable:$true] %s836
          %839 = dma.vmem_to_hbm [thread:$0]  %s837, 128, %s834, %s810
        $region40: #{tpu_custom_call.1} parent=23 // pred_fallthru
          _
      $region24: #{tpu_custom_call.1} parent=5 // pred_fallthru
        _
      %p840 = scmp.le.s32.totalorder 2, %s18
      // Predicated region
      $region41: #{tpu_custom_call.1} parent=5 // pred_check
        %p841 = pneg %p840
      $region42: #{tpu_custom_call.1} parent=5 // pred_check_branch
        %843 = sbr.rel (%p841) target = $region44
      $region43: #{tpu_custom_call.1} parent=5 // pred_region
        %s844 = ssub.s32 %s18, 2
        // Predicated region
        $region45: #{tpu_custom_call.1} parent=43 // pred_check
          %p845 = pneg %p87
        $region46: #{tpu_custom_call.1} parent=43 // pred_check_branch
          %847 = sbr.rel (%p845) target = $region48
        $region47: #{tpu_custom_call.1} parent=43 // pred_region
          %s848 = sand.u32 %s72, 1
          %s849 = scalar_lea.sflag [#allocation6], %s848
          %s850 = sand.u32 %s72, 1
          %s851 = smul.addr %s850, 8
          %s852 = scalar_lea.vmem [#allocation7], %s851
          %853 = dma.done %s849, 128
        $region48: #{tpu_custom_call.1} parent=43 // pred_fallthru
          _
        // Predicated region
        $region49: #{tpu_custom_call.1} parent=43 // pred_check
          %p854 = pneg %p113
        $region50: #{tpu_custom_call.1} parent=43 // pred_check_branch
          %856 = sbr.rel (%p854) target = $region52
        $region51: #{tpu_custom_call.1} parent=43 // pred_region
          %s857 = sand.u32 %s98, 1
          %s858 = scalar_lea.sflag [#allocation9], %s857
          %s859 = sand.u32 %s98, 1
          %s860 = smul.addr %s859, 8
          %s861 = scalar_lea.vmem [#allocation8], %s860
          %862 = dma.done %s858, 128
        $region52: #{tpu_custom_call.1} parent=43 // pred_fallthru
          _
      $region44: #{tpu_custom_call.1} parent=5 // pred_fallthru
        _
    $region6: #{tpu_custom_call.1} parent=1 // loop_footer
      %s22 = sadd.s32 1, %s18
    $region7: #{tpu_custom_call.1} parent=1 // loop_footer_branch
      %17 = sbr.rel target = $region3
    $region8: #{tpu_custom_call.1} parent=1 // loop_exit
      _
    %863 = vsyncpa [#allocation5], 1
    %s864 = scalar_lea.sflag [#allocation5], 1
    %865 = vsyncpa %s864, 1
    %866 = vsyncpa [#allocation6], 1
    %s867 = scalar_lea.sflag [#allocation6], 1
    %868 = vsyncpa %s867, 1
    %869 = vsyncpa [#allocation9], 1
    %s870 = scalar_lea.sflag [#allocation9], 1
    %871 = vsyncpa %s870, 1

</llo_original>
